<compile_context>
chip_gen: v5e
topology: v5e:2x2
jax: 0.10.0
libtpu: 0.0.40
codegen_flags: <defaults>
</compile_context>

<pallas_src>
import functools

import jax
import jax.numpy as jnp
from jax import lax
from jax.experimental import pallas as pl
from jax.experimental.pallas import tpu as pltpu


def _round_up(a, m):
    return ((a + m - 1) // m) * m


def _num_tensorcores():
    """Best-effort TensorCore-per-chip count. Defaults to 1 (v5e/v6e)."""
    try:
        info = pltpu.get_tpu_info()
        for attr in ("num_cores", "tensorcores_per_chip", "num_tensorcores",
                     "cores_per_chip"):
            n = getattr(info, attr, None)
            if isinstance(n, int) and n > 0:
                return n
    except Exception:
        pass
    try:
        n = getattr(jax.devices()[0], "num_cores", None)
        if isinstance(n, int) and n > 0:
            return n
    except Exception:
        pass
    return 1


def _choose_tiling(B, num_cores, max_tile_b):
    """Returns (B_padded, tile_b) with B_padded % tile_b == 0."""
    num_cores = max(int(num_cores), 1)
    if num_cores == 1 and B <= max_tile_b:
        # Single TC: grid is a sequential loop; one full-array tile means no
        # extra per-step overhead and no (8,128) constraint on the block.
        return B, B
    target_tiles = max(num_cores, -(-B // max_tile_b))
    tile_b = min(max_tile_b, _round_up(-(-B // target_tiles), 128))
    B_pad = _round_up(B, tile_b)
    if B_pad // tile_b < num_cores:
        # v7x: make sure every TensorCore gets at least one lane-dense tile.
        B_pad = tile_b * num_cores
    return B_pad, tile_b


def fcn_kernel(n_hidden_layers, scalar_out, x_ref, w0_ref, b0_ref, *refs):
    """Full MLP forward for one lane-dense batch tile.

    Column / "batch-on-lanes" layout:
      x_ref : (n_in,  tile_b)
      w0_ref: (H, n_in)         b0_ref: (H, 1)        # PyTorch (out, in)
      wh_ref: (L-1, H, H)       bh_ref: (L-1, H, 1)   # PyTorch (out, in)
      we_ref: (H, 1) if scalar_out else (n_out, H)    # (n_out, 1) bias
      o_ref : (n_out, tile_b)
    """
    if n_hidden_layers > 0:
        wh_ref, bh_ref, we_ref, be_ref, o_ref = refs
    else:
        we_ref, be_ref, o_ref = refs

    x = x_ref[...]                                   # (n_in, tile_b)
    w0 = w0_ref[...]                                 # (H, n_in)
    if w0.shape[1] == 1:
        # K=1 input layer: pure VPU broadcast multiply, no MXU round-trip.
        pre = w0 * x + b0_ref[...]                   # (H, tile_b)
    else:
        pre = jnp.dot(w0, x, preferred_element_type=jnp.float32) + b0_ref[...]
    h = jnp.tanh(pre)                                # (H, tile_b)

    if n_hidden_layers > 0:
        if n_hidden_layers > 8:
            # Deep stack: fori_loop bounds vreg live ranges / code size.
            def body(layer, hc):
                return jnp.tanh(
                    jnp.dot(wh_ref[layer], hc, preferred_element_type=jnp.float32)
                    + bh_ref[layer])
            h = lax.fori_loop(0, n_hidden_layers, body, h)
        else:
            for layer in range(n_hidden_layers):
                h = jnp.tanh(
                    jnp.dot(wh_ref[layer], h, preferred_element_type=jnp.float32)
                    + bh_ref[layer])

    if scalar_out:
        # N=1 output: VPU multiply + sublane (XLU) reduce -> lane-dense (1, tile_b).
        out = jnp.sum(we_ref[...] * h, axis=0, keepdims=True) + be_ref[...]
    else:
        # Standard (n_out, H) @ (H, tile_b) contraction — no LHS transpose needed.
        out = jnp.dot(we_ref[...], h, preferred_element_type=jnp.float32) + be_ref[...]

    o_ref[...] = out.astype(o_ref.dtype)


def fcn_forward(x, params, *, tile_b=None, num_cores=None, max_tile_b=8192):
    """Run the full MLP forward pass in a single Pallas kernel, tiled over batch."""
    w0, b0, wh, bh, we, be = params                  # PyTorch layouts
    B, n_in = x.shape
    H = w0.shape[0]
    n_hidden = wh.shape[0]
    n_out = we.shape[0]
    scalar_out = (n_out == 1)

    if num_cores is None:
        num_cores = _num_tensorcores()

    if tile_b is None:
        B_pad, tile_b = _choose_tiling(B, num_cores, max_tile_b)
    else:
        if not (tile_b == B or tile_b % 128 == 0):
            raise ValueError("tile_b must equal B or be a multiple of 128 "
                             "(TPU lane width) to satisfy the (8,128) rule")
        B_pad = _round_up(B, tile_b)
    grid = (B_pad // tile_b,)

    # Wrapper-side layout plumbing only: batch on lanes for lane-dense DMA/stores.
    x_col = x.T                                      # (n_in, B)
    if B_pad != B:
        x_col = jnp.pad(x_col, ((0, 0), (0, B_pad - B)))

    # n_out == 1: (H, 1) layout feeds the VPU/XLU fast path.
    # n_out  > 1: keep PyTorch (n_out, H) so the kernel does a plain MXU matmul.
    we_k = we.T if scalar_out else we

    kernel = functools.partial(fcn_kernel, n_hidden, scalar_out)

    # Grid-invariant weights: single-buffer once the stack is large (v7x VMEM);
    # tiny PINN weights keep the default (well-tested) double-buffering.
    itemsize = jnp.dtype(x.dtype).itemsize
    weight_bytes = (w0.size + b0.size + wh.size + bh.size + we.size + be.size) * itemsize
    big_weights = weight_bytes > (4 << 20)

    def const_spec(shape):
        idx = (lambda i: (0,) * len(shape))
        if big_weights:
            return pl.BlockSpec(shape, idx, pipeline_mode=pl.Buffered(1))
        return pl.BlockSpec(shape, idx)

    in_specs = [
        pl.BlockSpec((n_in, tile_b), lambda i: (0, i)),   # x tile (lane-dense)
        const_spec(w0.shape),
        const_spec(b0.shape),
    ]
    operands = [x_col, w0, b0]
    if n_hidden > 0:
        in_specs += [const_spec(wh.shape), const_spec(bh.shape)]
        operands += [wh, bh]
    in_specs += [const_spec(we_k.shape), const_spec(be.shape)]
    operands += [we_k, be]

    cost = pl.CostEstimate(
        flops=2 * B_pad * (n_in * H + n_hidden * H * H + H * n_out),
        transcendentals=B_pad * H * (1 + n_hidden),
        bytes_accessed=int(itemsize * (x_col.size + B_pad * n_out) + weight_bytes),
    )

    out_col = pl.pallas_call(
        kernel,
        out_shape=jax.ShapeDtypeStruct((n_out, B_pad), x.dtype),
        grid_spec=pl.GridSpec(
            grid=grid,
            in_specs=in_specs,
            out_specs=pl.BlockSpec((n_out, tile_b), lambda i: (0, i)),
        ),
        compiler_params=pltpu.CompilerParams(
            dimension_semantics=("parallel",),
        ),
        cost_estimate=cost,
    )(*operands)

    if B_pad != B:
        out_col = out_col[:, :B]
    return out_col.T                                  # (B, n_out)


def init_params(key, n_in, n_out, n_hidden, n_layers, dtype=jnp.float32):
    """nn.Linear-style uniform(-1/sqrt(fan_in), 1/sqrt(fan_in)) init.

    PyTorch layouts:
      w0: (H, n_in), b0: (H, 1)
      wh: (n_layers-1, H, H), bh: (n_layers-1, H, 1)
      we: (n_out, H), be: (n_out, 1)
    """
    keys = jax.random.split(key, 2 * (n_layers + 1))

    def linear(kw, kb, fan_in, fan_out):
        bound = 1.0 / float(fan_in) ** 0.5
        w = jax.random.uniform(kw, (fan_out, fan_in), dtype, -bound, bound)
        b = jax.random.uniform(kb, (fan_out, 1), dtype, -bound, bound)
        return w, b

    w0, b0 = linear(keys[0], keys[1], n_in, n_hidden)
    whs, bhs = [], []
    for layer in range(n_layers - 1):
        w, b = linear(keys[2 + 2 * layer], keys[3 + 2 * layer], n_hidden, n_hidden)
        whs.append(w)
        bhs.append(b)
    if whs:
        wh = jnp.stack(whs)
        bh = jnp.stack(bhs)
    else:                                            # N_LAYERS == 1: no hidden layers
        wh = jnp.zeros((0, n_hidden, n_hidden), dtype)
        bh = jnp.zeros((0, n_hidden, 1), dtype)
    we, be = linear(keys[-2], keys[-1], n_hidden, n_out)
    return w0, b0, wh, bh, we, be


def fcn_reference(x, params):
    """Plain-JAX reference of the PyTorch forward pass (same param layouts)."""
    w0, b0, wh, bh, we, be = params
    h = jnp.tanh(x @ w0.T + b0[:, 0])
    for layer in range(wh.shape[0]):
        h = jnp.tanh(h @ wh[layer].T + bh[layer, :, 0])
    return h @ we.T + be[:, 0]


if __name__ == "__main__":
    key = jax.random.PRNGKey(0)

    # Test 1: PINN-style config (scalar in/out) -> VPU/XLU fast paths.
    N_INPUT, N_OUTPUT, N_HIDDEN, N_LAYERS = 1, 1, 32, 3
    BATCH = 256
    k1, k2, k3, k4 = jax.random.split(key, 4)
    x1 = jax.random.uniform(k1, (BATCH, N_INPUT), jnp.float32, -1.0, 1.0)
    p1 = init_params(k2, N_INPUT, N_OUTPUT, N_HIDDEN, N_LAYERS)
    out1 = jax.block_until_ready(fcn_forward(x1, p1))
    ref1 = fcn_reference(x1, p1)
    assert out1.shape == (BATCH, N_OUTPUT)
    assert jnp.allclose(out1, ref1, atol=5e-5, rtol=5e-5), "mismatch (scalar I/O)"

    # Test 2: wide I/O config -> exercises the MXU input/output fallback paths.
    N_INPUT2, N_OUTPUT2, N_HIDDEN2, N_LAYERS2 = 4, 3, 64, 4
    BATCH2 = 128
    x2 = jax.random.uniform(k3, (BATCH2, N_INPUT2), jnp.float32, -1.0, 1.0)
    p2 = init_params(k4, N_INPUT2, N_OUTPUT2, N_HIDDEN2, N_LAYERS2)
    out2 = jax.block_until_ready(fcn_forward(x2, p2))
    ref2 = fcn_reference(x2, p2)
    assert out2.shape == (BATCH2, N_OUTPUT2)
    assert jnp.allclose(out2, ref2, atol=5e-5, rtol=5e-5), "mismatch (wide I/O)"

    print("KERNEL_OK")
</pallas_src>

<mosaic_0001>
module attributes {stable_mosaic.version = 11 : i64} {
  func.func @fcn_kernel(%arg0: i32, %arg1: memref<1x256xf32, #tpu.memory_space<vmem>>, %arg2: memref<32x1xf32, #tpu.memory_space<vmem>>, %arg3: memref<32x1xf32, #tpu.memory_space<vmem>>, %arg4: memref<2x32x32xf32, #tpu.memory_space<vmem>>, %arg5: memref<2x32x1xf32, #tpu.memory_space<vmem>>, %arg6: memref<32x1xf32, #tpu.memory_space<vmem>>, %arg7: memref<1x1xf32, #tpu.memory_space<vmem>>, %arg8: memref<1x256xf32, #tpu.memory_space<vmem>>) attributes {dimension_semantics = [#tpu.dimension_semantics<parallel>], iteration_bounds = array<i64: 1>, scalar_prefetch = 0 : i64, scratch_operands = 0 : i64, tpu.core_type = #tpu.core_type<tc>, window_params = [{transform_indices = @transform_0, window_bounds = array<i64: 1, 256>}, {pipeline_mode = #tpu.pipeline_mode<synchronous>, transform_indices = @transform_1, window_bounds = array<i64: 32, 1>}, {pipeline_mode = #tpu.pipeline_mode<synchronous>, transform_indices = @transform_2, window_bounds = array<i64: 32, 1>}, {pipeline_mode = #tpu.pipeline_mode<synchronous>, transform_indices = @transform_3, window_bounds = array<i64: 2, 32, 32>}, {pipeline_mode = #tpu.pipeline_mode<synchronous>, transform_indices = @transform_4, window_bounds = array<i64: 2, 32, 1>}, {pipeline_mode = #tpu.pipeline_mode<synchronous>, transform_indices = @transform_5, window_bounds = array<i64: 32, 1>}, {pipeline_mode = #tpu.pipeline_mode<synchronous>, transform_indices = @transform_6, window_bounds = array<i64: 1, 1>}, {transform_indices = @transform_7, window_bounds = array<i64: 1, 256>}]} {
    %c0 = arith.constant 0 : index
    %c0_0 = arith.constant 0 : index
    %0 = vector.load %arg1[%c0, %c0_0] : memref<1x256xf32, #tpu.memory_space<vmem>>, vector<1x256xf32>
    %c0_1 = arith.constant 0 : index
    %c0_2 = arith.constant 0 : index
    %1 = vector.load %arg2[%c0_1, %c0_2] : memref<32x1xf32, #tpu.memory_space<vmem>>, vector<32x1xf32>
    %2 = vector.broadcast %1 : vector<32x1xf32> to vector<32x256xf32>
    %3 = vector.broadcast %0 : vector<1x256xf32> to vector<32x256xf32>
    %4 = arith.mulf %2, %3 : vector<32x256xf32>
    %c0_3 = arith.constant 0 : index
    %c0_4 = arith.constant 0 : index
    %5 = vector.load %arg3[%c0_3, %c0_4] : memref<32x1xf32, #tpu.memory_space<vmem>>, vector<32x1xf32>
    %6 = vector.broadcast %5 : vector<32x1xf32> to vector<32x256xf32>
    %7 = arith.addf %4, %6 : vector<32x256xf32>
    %8 = math.tanh %7 : vector<32x256xf32>
    %c0_5 = arith.constant 0 : index
    %c0_6 = arith.constant 0 : index
    %c0_7 = arith.constant 0 : index
    %9 = vector.load %arg4[%c0_5, %c0_6, %c0_7] : memref<2x32x32xf32, #tpu.memory_space<vmem>>, vector<1x32x32xf32>
    %10 = vector.shape_cast %9 : vector<1x32x32xf32> to vector<32x32xf32>
    %cst = arith.constant dense<0.000000e+00> : vector<32x256xf32>
    %11 = tpu.matmul %10, %8, %cst {dimension_numbers = #tpu.dot_dimension_numbers<[1], [0], [0], [1], [0, 0, 1, 1], [], []>} : vector<32x32xf32>, vector<32x256xf32>, vector<32x256xf32> -> vector<32x256xf32>
    %c0_8 = arith.constant 0 : index
    %c0_9 = arith.constant 0 : index
    %c0_10 = arith.constant 0 : index
    %12 = vector.load %arg5[%c0_8, %c0_9, %c0_10] : memref<2x32x1xf32, #tpu.memory_space<vmem>>, vector<1x32x1xf32>
    %13 = vector.shape_cast %12 : vector<1x32x1xf32> to vector<32x1xf32>
    %14 = vector.broadcast %13 : vector<32x1xf32> to vector<32x256xf32>
    %15 = arith.addf %11, %14 : vector<32x256xf32>
    %16 = math.tanh %15 : vector<32x256xf32>
    %c1 = arith.constant 1 : index
    %c0_11 = arith.constant 0 : index
    %c0_12 = arith.constant 0 : index
    %17 = vector.load %arg4[%c1, %c0_11, %c0_12] : memref<2x32x32xf32, #tpu.memory_space<vmem>>, vector<1x32x32xf32>
    %18 = vector.shape_cast %17 : vector<1x32x32xf32> to vector<32x32xf32>
    %cst_13 = arith.constant dense<0.000000e+00> : vector<32x256xf32>
    %19 = tpu.matmul %18, %16, %cst_13 {dimension_numbers = #tpu.dot_dimension_numbers<[1], [0], [0], [1], [0, 0, 1, 1], [], []>} : vector<32x32xf32>, vector<32x256xf32>, vector<32x256xf32> -> vector<32x256xf32>
    %c1_14 = arith.constant 1 : index
    %c0_15 = arith.constant 0 : index
    %c0_16 = arith.constant 0 : index
    %20 = vector.load %arg5[%c1_14, %c0_15, %c0_16] : memref<2x32x1xf32, #tpu.memory_space<vmem>>, vector<1x32x1xf32>
    %21 = vector.shape_cast %20 : vector<1x32x1xf32> to vector<32x1xf32>
    %22 = vector.broadcast %21 : vector<32x1xf32> to vector<32x256xf32>
    %23 = arith.addf %19, %22 : vector<32x256xf32>
    %24 = math.tanh %23 : vector<32x256xf32>
    %c0_17 = arith.constant 0 : index
    %c0_18 = arith.constant 0 : index
    %25 = vector.load %arg6[%c0_17, %c0_18] : memref<32x1xf32, #tpu.memory_space<vmem>>, vector<32x1xf32>
    %26 = vector.broadcast %25 : vector<32x1xf32> to vector<32x256xf32>
    %27 = arith.mulf %26, %24 : vector<32x256xf32>
    %cst_19 = arith.constant dense<0.000000e+00> : vector<256xf32>
    %28 = vector.multi_reduction <add>, %27, %cst_19 [0] : vector<32x256xf32> to vector<256xf32>
    %29 = vector.shape_cast %28 : vector<256xf32> to vector<1x256xf32>
    %c0_20 = arith.constant 0 : index
    %c0_21 = arith.constant 0 : index
    %30 = vector.load %arg7[%c0_20, %c0_21] : memref<1x1xf32, #tpu.memory_space<vmem>>, vector<1x1xf32>
    %31 = vector.broadcast %30 : vector<1x1xf32> to vector<1x256xf32>
    %32 = arith.addf %29, %31 : vector<1x256xf32>
    %c0_22 = arith.constant 0 : index
    %c0_23 = arith.constant 0 : index
    %33 = vector.load %arg8[%c0_22, %c0_23] : memref<1x256xf32, #tpu.memory_space<vmem>>, vector<1x256xf32>
    tpu.vector_store %arg8[%c0_22, %c0_23], %32 {strides = array<i32>} : memref<1x256xf32, #tpu.memory_space<vmem>>, vector<1x256xf32>,
    return
  }
  func.func @transform_0(%arg0: i32) -> (i32, i32) {
    %c0_i32 = arith.constant 0 : i32
    %c0_i32_0 = arith.constant 0 : i32
    return %c0_i32, %arg0 : i32, i32
  }
  func.func @transform_1(%arg0: i32) -> (i32, i32) {
    %c0_i32 = arith.constant 0 : i32
    %c0_i32_0 = arith.constant 0 : i32
    %c0_i32_1 = arith.constant 0 : i32
    return %c0_i32, %c0_i32_0 : i32, i32
  }
  func.func @transform_2(%arg0: i32) -> (i32, i32) {
    %c0_i32 = arith.constant 0 : i32
    %c0_i32_0 = arith.constant 0 : i32
    %c0_i32_1 = arith.constant 0 : i32
    return %c0_i32, %c0_i32_0 : i32, i32
  }
  func.func @transform_3(%arg0: i32) -> (i32, i32, i32) {
    %c0_i32 = arith.constant 0 : i32
    %c0_i32_0 = arith.constant 0 : i32
    %c0_i32_1 = arith.constant 0 : i32
    %c0_i32_2 = arith.constant 0 : i32
    return %c0_i32, %c0_i32_0, %c0_i32_1 : i32, i32, i32
  }
  func.func @transform_4(%arg0: i32) -> (i32, i32, i32) {
    %c0_i32 = arith.constant 0 : i32
    %c0_i32_0 = arith.constant 0 : i32
    %c0_i32_1 = arith.constant 0 : i32
    %c0_i32_2 = arith.constant 0 : i32
    return %c0_i32, %c0_i32_0, %c0_i32_1 : i32, i32, i32
  }
  func.func @transform_5(%arg0: i32) -> (i32, i32) {
    %c0_i32 = arith.constant 0 : i32
    %c0_i32_0 = arith.constant 0 : i32
    %c0_i32_1 = arith.constant 0 : i32
    return %c0_i32, %c0_i32_0 : i32, i32
  }
  func.func @transform_6(%arg0: i32) -> (i32, i32) {
    %c0_i32 = arith.constant 0 : i32
    %c0_i32_0 = arith.constant 0 : i32
    %c0_i32_1 = arith.constant 0 : i32
    return %c0_i32, %c0_i32_0 : i32, i32
  }
  func.func @transform_7(%arg0: i32) -> (i32, i32) {
    %c0_i32 = arith.constant 0 : i32
    %c0_i32_0 = arith.constant 0 : i32
    return %c0_i32, %arg0 : i32, i32
  }
}

</mosaic_0001>

<llo_original>
// kernel: tpu_custom_call.1
$region0: #{tpu_custom_call.1}
  #allocation0 [shape = 'u32[]', space=smem, size = 0x4, offset = 0x4, fixed_abs, tag = 'smem constant byte address 0x4 - core index']
  #allocation1 [shape = 'u32[72,128]{1,0:T(1,128)}', space=vmem, size = 0x9000, scoped, tag = 'internal scratch']
  #allocation2 [shape = 'f32[1,1]{1,0:T(1,128)S(1)}', space=vmem, size = 0x200, scoped, tag = 'scoped memory for tpu_custom_call.1']
  %s0 = inlined_call_operand.vmem [shape: f32[1,256], index: 0, kind: input, shape index: {}]
  %s1 = inlined_call_operand.vmem [shape: f32[32,1], index: 1, kind: input, shape index: {}]
  %s2 = inlined_call_operand.vmem [shape: f32[32,1], index: 2, kind: input, shape index: {}]
  %s3 = inlined_call_operand.vmem [shape: f32[2,32,32], index: 3, kind: input, shape index: {}]
  %s4 = inlined_call_operand.vmem [shape: f32[2,32,1], index: 4, kind: input, shape index: {}]
  %s5 = inlined_call_operand.vmem [shape: f32[32,1], index: 5, kind: input, shape index: {}]
  %s6 = inlined_call_operand.<no memory space> [shape: f32[1,1], index: 6, kind: input, shape index: {}]
  %s7 = inlined_call_operand.hbm [shape: f32[1,256], index: 7, kind: output, shape index: {}]
  %s8 = sld [smem:[#allocation0]]
  $region38: #{tpu_custom_call.1} parent=0
    _
  %s10 = ssub.s32 1, %s8
  %s11 = scalar_select 0, %s10, %s8
  %v12 = vstv %s6
  %13 = vst [vmem:[#allocation2] sm:$0x1] %v12
  $region1: #{tpu_custom_call.1} parent=0
    #allocation3 [shape = 'u8[1024]{0}', space=vmem, size = 0x400, scoped, tag = 'output window, operand 0, single buffered']
    #allocation4 [shape = 's32[1]{0}', space=sflag, size = 0x4, scoped, tag = 'scoped memory for tpu_custom_call.1']
    %14 = vsyncpa [#allocation4], 0
    // Predicated region
    $region2: #{tpu_custom_call.1} parent=1 // pred_check
      _
    $region3: #{tpu_custom_call.1} parent=1 // pred_check_branch
      %16 = sbr.rel (0) target = $region5
    $region4: #{tpu_custom_call.1} parent=1 // pred_region
      _
    $region5: #{tpu_custom_call.1} parent=1 // pred_fallthru
      _
    // Predicated region
    $region6: #{tpu_custom_call.1} parent=1 // pred_check
      _
    $region7: #{tpu_custom_call.1} parent=1 // pred_check_branch
      %18 = sbr.rel (0) target = $region9
    $region8: #{tpu_custom_call.1} parent=1 // pred_region
      _
    $region9: #{tpu_custom_call.1} parent=1 // pred_fallthru
      _
    // Predicated region
    $region10: #{tpu_custom_call.1} parent=1 // pred_check
      _
    $region11: #{tpu_custom_call.1} parent=1 // pred_check_branch
      %20 = sbr.rel (0) target = $region13
    $region12: #{tpu_custom_call.1} parent=1 // pred_region
      _
    $region13: #{tpu_custom_call.1} parent=1 // pred_fallthru
      _
    // Predicated region
    $region14: #{tpu_custom_call.1} parent=1 // pred_check
      _
    $region15: #{tpu_custom_call.1} parent=1 // pred_check_branch
      %22 = sbr.rel (0) target = $region17
    $region16: #{tpu_custom_call.1} parent=1 // pred_region
      _
    $region17: #{tpu_custom_call.1} parent=1 // pred_fallthru
      _
    // Predicated region
    $region18: #{tpu_custom_call.1} parent=1 // pred_check
      _
    $region19: #{tpu_custom_call.1} parent=1 // pred_check_branch
      %24 = sbr.rel (0) target = $region21
    $region20: #{tpu_custom_call.1} parent=1 // pred_region
      _
    $region21: #{tpu_custom_call.1} parent=1 // pred_fallthru
      _
    // Predicated region
    $region22: #{tpu_custom_call.1} parent=1 // pred_check
      _
    $region23: #{tpu_custom_call.1} parent=1 // pred_check_branch
      %26 = sbr.rel (0) target = $region25
    $region24: #{tpu_custom_call.1} parent=1 // pred_region
      _
    $region25: #{tpu_custom_call.1} parent=1 // pred_fallthru
      _
    // Predicated region
    $region26: #{tpu_custom_call.1} parent=1 // pred_check
      _
    $region27: #{tpu_custom_call.1} parent=1 // pred_check_branch
      %28 = sbr.rel (0) target = $region29
    $region28: #{tpu_custom_call.1} parent=1 // pred_region
      _
    $region29: #{tpu_custom_call.1} parent=1 // pred_fallthru
      _
    %v29 = vld [vmem:[%s0] sm:$0x3]
    %v30 = vld [vmem:[%s1] sm:$0xff]
    %v31 = vld [vmem:[%s1 + $0x8] sm:$0xff]
    %v32 = vld [vmem:[%s1 + $0x10] sm:$0xff]
    %v33 = vld [vmem:[%s1 + $0x18] sm:$0xff]
    %35 = vset.pattern.permute.xlu0 0
    %36 = vperm.xlu0 %35, %v30
    %v37 = vpop.permute.xlu0 %36
    %40 = vset.pattern.permute.xlu0 0
    %41 = vperm.xlu0 %40, %v31
    %v42 = vpop.permute.xlu0 %41
    %45 = vset.pattern.permute.xlu0 0
    %46 = vperm.xlu0 %45, %v32
    %v47 = vpop.permute.xlu0 %46
    %50 = vset.pattern.permute.xlu0 0
    %51 = vperm.xlu0 %50, %v33
    %v52 = vpop.permute.xlu0 %51
    %v55 = vperm.slane %v29, 0
    %v56 = vperm.slane %v29, 1
    %v59 = vmul.f32 %v37, %v55
    %v60 = vmul.f32 %v37, %v56
    %v61 = vmul.f32 %v42, %v55
    %v62 = vmul.f32 %v42, %v56
    %v63 = vmul.f32 %v47, %v55
    %v64 = vmul.f32 %v47, %v56
    %v65 = vmul.f32 %v52, %v55
    %v66 = vmul.f32 %v52, %v56
    %v67 = vld [vmem:[%s2] sm:$0xff]
    %v68 = vld [vmem:[%s2 + $0x8] sm:$0xff]
    %v69 = vld [vmem:[%s2 + $0x10] sm:$0xff]
    %v70 = vld [vmem:[%s2 + $0x18] sm:$0xff]
    %72 = vset.pattern.permute.xlu0 0
    %73 = vperm.xlu0 %72, %v67
    %v74 = vpop.permute.xlu0 %73
    %77 = vset.pattern.permute.xlu0 0
    %78 = vperm.xlu0 %77, %v68
    %v79 = vpop.permute.xlu0 %78
    %82 = vset.pattern.permute.xlu0 0
    %83 = vperm.xlu0 %82, %v69
    %v84 = vpop.permute.xlu0 %83
    %87 = vset.pattern.permute.xlu0 0
    %88 = vperm.xlu0 %87, %v70
    %v89 = vpop.permute.xlu0 %88
    %v91 = vadd.f32 %v59, %v74
    %v92 = vadd.f32 %v60, %v74
    %v93 = vadd.f32 %v61, %v79
    %v94 = vadd.f32 %v62, %v79
    %v95 = vadd.f32 %v63, %v84
    %v96 = vadd.f32 %v64, %v84
    %v97 = vadd.f32 %v65, %v89
    %v98 = vadd.f32 %v66, %v89
    %v99 = vtanh.pop %v91
    %v100 = vtanh.pop %v92
    %v101 = vtanh.pop %v93
    %v102 = vtanh.pop %v94
    %v103 = vtanh.pop %v95
    %v104 = vtanh.pop %v96
    %v105 = vtanh.pop %v97
    %v106 = vtanh.pop %v98
    %v107 = vld [vmem:[%s3] sm:$0xff]
    %v108 = vld [vmem:[%s3 + $0x8] sm:$0xff]
    %v109 = vld [vmem:[%s3 + $0x10] sm:$0xff]
    %v110 = vld [vmem:[%s3 + $0x18] sm:$0xff]
    %v111 = vld [vmem:[%s4] sm:$0xff]
    %v112 = vld [vmem:[%s4 + $0x8] sm:$0xff]
    %v113 = vld [vmem:[%s4 + $0x10] sm:$0xff]
    %v114 = vld [vmem:[%s4 + $0x18] sm:$0xff]
    %116 = vset.pattern.permute.xlu0 0
    %117 = vperm.xlu0 %116, %v111
    %v118 = vpop.permute.xlu0 %117
    %121 = vset.pattern.permute.xlu0 0
    %122 = vperm.xlu0 %121, %v112
    %v123 = vpop.permute.xlu0 %122
    %126 = vset.pattern.permute.xlu0 0
    %127 = vperm.xlu0 %126, %v113
    %v128 = vpop.permute.xlu0 %127
    %131 = vset.pattern.permute.xlu0 0
    %132 = vperm.xlu0 %131, %v114
    %v133 = vpop.permute.xlu0 %132
    %vm135 = vcmask 261120
    %v137 = vsel %vm135, %v107, 0
    %v140 = vsel %vm135, %v108, 0
    %v143 = vsel %vm135, %v109, 0
    %v146 = vsel %vm135, %v110, 0
    %148 = vmatpush.msra.mxu0 0.0
    %149 = vmatpush.msra.mxu0 0.0
    %150 = vmatpush.msra.mxu0 0.0
    %151 = vmatpush.msra.mxu0 0.0
    %152 = vmatpush.msra.mxu0 0.0
    %153 = vmatpush.msra.mxu0 0.0
    %154 = vmatpush.msra.mxu0 0.0
    %155 = vmatpush.msra.mxu0 0.0
    %156 = vmatpush.msra.mxu0 0.0
    %157 = vmatpush.msra.mxu0 0.0
    %158 = vmatpush.msra.mxu0 0.0
    %159 = vmatpush.msra.mxu0 0.0
    %160 = vmatpush.msra.mxu0 %v105
    %161 = vmatpush.msra.mxu0 %v103
    %162 = vmatpush.msra.mxu0 %v101
    %163 = vmatpush.msra.mxu0 %v99
    %164 = vmatmul.f32.gmra.mxu0 %v137
    %v165 = vpop.f32.mrf.mxu0
    %v166 = vadd.f32 %v118, %v165
    %167 = vmatmul.f32.gmra.mxu0 %v140
    %v168 = vpop.f32.mrf.mxu0
    %v169 = vadd.f32 %v123, %v168
    %170 = vmatmul.f32.gmra.mxu0 %v143
    %v171 = vpop.f32.mrf.mxu0
    %v172 = vadd.f32 %v128, %v171
    %173 = vmatmul.f32.gmra.mxu0 %v146
    %v174 = vpop.f32.mrf.mxu0
    %v175 = vadd.f32 %v133, %v174
    %176 = vdwg.mxu0
    %177 = vmatpush.msra.mxu0 0.0
    %178 = vmatpush.msra.mxu0 0.0
    %179 = vmatpush.msra.mxu0 0.0
    %180 = vmatpush.msra.mxu0 0.0
    %181 = vmatpush.msra.mxu0 0.0
    %182 = vmatpush.msra.mxu0 0.0
    %183 = vmatpush.msra.mxu0 0.0
    %184 = vmatpush.msra.mxu0 0.0
    %185 = vmatpush.msra.mxu0 0.0
    %186 = vmatpush.msra.mxu0 0.0
    %187 = vmatpush.msra.mxu0 0.0
    %188 = vmatpush.msra.mxu0 0.0
    %189 = vmatpush.msra.mxu0 %v106
    %190 = vmatpush.msra.mxu0 %v104
    %191 = vmatpush.msra.mxu0 %v102
    %192 = vmatpush.msra.mxu0 %v100
    %193 = vmatmul.f32.gmra.mxu0 %v137
    %v194 = vpop.f32.mrf.mxu0
    %v195 = vadd.f32 %v118, %v194
    %196 = vmatmul.f32.gmra.mxu0 %v140
    %v197 = vpop.f32.mrf.mxu0
    %v198 = vadd.f32 %v123, %v197
    %199 = vmatmul.f32.gmra.mxu0 %v143
    %v200 = vpop.f32.mrf.mxu0
    %v201 = vadd.f32 %v128, %v200
    %202 = vmatmul.f32.gmra.mxu0 %v146
    %v203 = vpop.f32.mrf.mxu0
    %v204 = vadd.f32 %v133, %v203
    %205 = vdwg.mxu0
    %v206 = vtanh.pop %v166
    %v207 = vtanh.pop %v195
    %v208 = vtanh.pop %v169
    %v209 = vtanh.pop %v198
    %v210 = vtanh.pop %v172
    %v211 = vtanh.pop %v201
    %v212 = vtanh.pop %v175
    %v213 = vtanh.pop %v204
    %s214 = scalar_lea.vmem %s3, 32
    %v215 = vld [vmem:[%s214] sm:$0xff]
    %v216 = vld [vmem:[%s214 + $0x8] sm:$0xff]
    %v217 = vld [vmem:[%s214 + $0x10] sm:$0xff]
    %v218 = vld [vmem:[%s214 + $0x18] sm:$0xff]
    %s219 = scalar_lea.vmem %s4, 32
    %v220 = vld [vmem:[%s219] sm:$0xff]
    %v221 = vld [vmem:[%s219 + $0x8] sm:$0xff]
    %v222 = vld [vmem:[%s219 + $0x10] sm:$0xff]
    %v223 = vld [vmem:[%s219 + $0x18] sm:$0xff]
    %225 = vset.pattern.permute.xlu0 0
    %226 = vperm.xlu0 %225, %v220
    %v227 = vpop.permute.xlu0 %226
    %230 = vset.pattern.permute.xlu0 0
    %231 = vperm.xlu0 %230, %v221
    %v232 = vpop.permute.xlu0 %231
    %235 = vset.pattern.permute.xlu0 0
    %236 = vperm.xlu0 %235, %v222
    %v237 = vpop.permute.xlu0 %236
    %240 = vset.pattern.permute.xlu0 0
    %241 = vperm.xlu0 %240, %v223
    %v242 = vpop.permute.xlu0 %241
    %v245 = vsel %vm135, %v215, 0
    %v248 = vsel %vm135, %v216, 0
    %v251 = vsel %vm135, %v217, 0
    %v254 = vsel %vm135, %v218, 0
    %256 = vmatpush.msra.mxu0 0.0
    %257 = vmatpush.msra.mxu0 0.0
    %258 = vmatpush.msra.mxu0 0.0
    %259 = vmatpush.msra.mxu0 0.0
    %260 = vmatpush.msra.mxu0 0.0
    %261 = vmatpush.msra.mxu0 0.0
    %262 = vmatpush.msra.mxu0 0.0
    %263 = vmatpush.msra.mxu0 0.0
    %264 = vmatpush.msra.mxu0 0.0
    %265 = vmatpush.msra.mxu0 0.0
    %266 = vmatpush.msra.mxu0 0.0
    %267 = vmatpush.msra.mxu0 0.0
    %268 = vmatpush.msra.mxu0 %v212
    %269 = vmatpush.msra.mxu0 %v210
    %270 = vmatpush.msra.mxu0 %v208
    %271 = vmatpush.msra.mxu0 %v206
    %272 = vmatmul.f32.gmra.mxu0 %v245
    %v273 = vpop.f32.mrf.mxu0
    %v274 = vadd.f32 %v227, %v273
    %275 = vmatmul.f32.gmra.mxu0 %v248
    %v276 = vpop.f32.mrf.mxu0
    %v277 = vadd.f32 %v232, %v276
    %278 = vmatmul.f32.gmra.mxu0 %v251
    %v279 = vpop.f32.mrf.mxu0
    %v280 = vadd.f32 %v237, %v279
    %281 = vmatmul.f32.gmra.mxu0 %v254
    %v282 = vpop.f32.mrf.mxu0
    %v283 = vadd.f32 %v242, %v282
    %284 = vdwg.mxu0
    %285 = vmatpush.msra.mxu0 0.0
    %286 = vmatpush.msra.mxu0 0.0
    %287 = vmatpush.msra.mxu0 0.0
    %288 = vmatpush.msra.mxu0 0.0
    %289 = vmatpush.msra.mxu0 0.0
    %290 = vmatpush.msra.mxu0 0.0
    %291 = vmatpush.msra.mxu0 0.0
    %292 = vmatpush.msra.mxu0 0.0
    %293 = vmatpush.msra.mxu0 0.0
    %294 = vmatpush.msra.mxu0 0.0
    %295 = vmatpush.msra.mxu0 0.0
    %296 = vmatpush.msra.mxu0 0.0
    %297 = vmatpush.msra.mxu0 %v213
    %298 = vmatpush.msra.mxu0 %v211
    %299 = vmatpush.msra.mxu0 %v209
    %300 = vmatpush.msra.mxu0 %v207
    %301 = vmatmul.f32.gmra.mxu0 %v245
    %v302 = vpop.f32.mrf.mxu0
    %v303 = vadd.f32 %v227, %v302
    %304 = vmatmul.f32.gmra.mxu0 %v248
    %v305 = vpop.f32.mrf.mxu0
    %v306 = vadd.f32 %v232, %v305
    %307 = vmatmul.f32.gmra.mxu0 %v251
    %v308 = vpop.f32.mrf.mxu0
    %v309 = vadd.f32 %v237, %v308
    %310 = vmatmul.f32.gmra.mxu0 %v254
    %v311 = vpop.f32.mrf.mxu0
    %v312 = vadd.f32 %v242, %v311
    %313 = vdwg.mxu0
    %v314 = vtanh.pop %v274
    %v315 = vtanh.pop %v303
    %v316 = vtanh.pop %v277
    %v317 = vtanh.pop %v306
    %v318 = vtanh.pop %v280
    %v319 = vtanh.pop %v309
    %v320 = vtanh.pop %v283
    %v321 = vtanh.pop %v312
    %v322 = vld [vmem:[%s5] sm:$0xff]
    %v323 = vld [vmem:[%s5 + $0x8] sm:$0xff]
    %v324 = vld [vmem:[%s5 + $0x10] sm:$0xff]
    %v325 = vld [vmem:[%s5 + $0x18] sm:$0xff]
    %327 = vset.pattern.permute.xlu0 0
    %328 = vperm.xlu0 %327, %v322
    %v329 = vpop.permute.xlu0 %328
    %332 = vset.pattern.permute.xlu0 0
    %333 = vperm.xlu0 %332, %v323
    %v334 = vpop.permute.xlu0 %333
    %337 = vset.pattern.permute.xlu0 0
    %338 = vperm.xlu0 %337, %v324
    %v339 = vpop.permute.xlu0 %338
    %342 = vset.pattern.permute.xlu0 0
    %343 = vperm.xlu0 %342, %v325
    %v344 = vpop.permute.xlu0 %343
    %v346 = vmul.f32 %v329, %v314
    %v347 = vmul.f32 %v329, %v315
    %v348 = vmul.f32 %v334, %v316
    %v349 = vmul.f32 %v334, %v317
    %v350 = vmul.f32 %v339, %v318
    %v351 = vmul.f32 %v339, %v319
    %v352 = vmul.f32 %v344, %v320
    %v353 = vmul.f32 %v344, %v321
    %v354 = vadd.f32 %v346, %v348
    %v355 = vadd.f32 %v354, %v350
    %v356 = vadd.f32 %v355, %v352
    %v357 = vrot.slane %v356, 4
    %v358 = vadd.f32 %v356, %v357
    %v359 = vrot.slane %v358, 2
    %v360 = vadd.f32 %v358, %v359
    %v361 = vrot.slane %v360, 1
    %v362 = vadd.f32 %v360, %v361
    %v363 = vadd.f32 %v347, %v349
    %v364 = vadd.f32 %v363, %v351
    %v365 = vadd.f32 %v364, %v353
    %v366 = vrot.slane %v365, 4
    %v367 = vadd.f32 %v365, %v366
    %v368 = vrot.slane %v367, 2
    %v369 = vadd.f32 %v367, %v368
    %v370 = vrot.slane %v369, 1
    %v371 = vadd.f32 %v369, %v370
    %v372 = vld [vmem:[#allocation2] sm:$0x1]
    %374 = vset.pattern.permute.xlu0 0
    %375 = vperm.xlu0 %374, %v372
    %v376 = vpop.permute.xlu0 %375
    %v378 = vperm.slane %v376, 0
    %v379 = vadd.f32 %v362, %v378
    %v380 = vadd.f32 %v371, %v378
    %v383 = vrot.slane %v380, 7
    %vm384 = vcmask 1040384
    %v385 = vsel %vm384, %v379, %v383
    %v387 = vlaneseq
    %vm388 = vcmp.ge.s32.totalorder %v387, 0
    %vm389 = vcmp.lt.s32.totalorder %v387, 256
    %vm390 = vmand %vm388, %vm389
    %391 = vst.msk [vmem:[#allocation3] sm:$0x3] %vm390, %v385
    // Predicated region
    $region30: #{tpu_custom_call.1} parent=1 // pred_check
      _
    $region31: #{tpu_custom_call.1} parent=1 // pred_check_branch
      %393 = sbr.rel (0) target = $region33
    $region32: #{tpu_custom_call.1} parent=1 // pred_region
      %395 = vsyncadd [#allocation4], 0
      %s397 = sshll.u32 [#allocation3], 4
      %s398 = int_to_ptr.vmem [resolvable:$true] %s397
      %s399 = sshll.u32 %s7, 4
      %s400 = int_to_ptr.hbm [resolvable:$true] %s399
      %402 = dma.vmem_to_hbm [thread:$0]  %s398, 32, %s400, [#allocation4]
    $region33: #{tpu_custom_call.1} parent=1 // pred_fallthru
      _
    // Predicated region
    $region34: #{tpu_custom_call.1} parent=1 // pred_check
      _
    $region35: #{tpu_custom_call.1} parent=1 // pred_check_branch
      %404 = sbr.rel (0) target = $region37
    $region36: #{tpu_custom_call.1} parent=1 // pred_region
      %406 = dma.done [#allocation4], 32
    $region37: #{tpu_custom_call.1} parent=1 // pred_fallthru
      _
    %407 = vsyncpa [#allocation4], 1

</llo_original>
